<compile_context>
chip_gen: v5e
topology: v5e:2x2
jax: 0.10.0
libtpu: 0.0.40
codegen_flags: <defaults>
</compile_context>

<pallas_src>
import jax
import jax.numpy as jnp
from jax.experimental import pallas as pl
from jax.experimental.pallas import tpu as pltpu


# ----------------------------------------------------------------------------
# Kernel
# ----------------------------------------------------------------------------
def _encoder_kernel(x_ref, w1_ref, b1_ref, wh_ref, bh_ref, out_ref):
    # fc1 + ReLU: MXU matmul with f32 accumulation; bias add / ReLU in f32 on
    # the VPU (keeps the epilogue cheap on v5e, which has no bf16 VALU).
    x = x_ref[...]
    h = jnp.dot(x, w1_ref[...], preferred_element_type=jnp.float32) + b1_ref[...]
    h = jnp.maximum(h, 0.0)

    # Fused mean|std head: one matmul into a lane-dense padded slab, one
    # unmasked lane-dense store.
    h = h.astype(wh_ref.dtype)
    out_ref[...] = (jnp.dot(h, wh_ref[...], preferred_element_type=jnp.float32)
                    + bh_ref[...]).astype(out_ref.dtype)


# ----------------------------------------------------------------------------
# Helpers
# ----------------------------------------------------------------------------
def _round_up(x, m):
    return ((x + m - 1) // m) * m


def _vmem_capacity_bytes():
    """Per-core VMEM capacity; conservative 64 MiB (v7x) fallback."""
    try:
        cap = int(getattr(pltpu.get_tpu_info(), "vmem_capacity_bytes", 0))
        if cap > 0:
            return cap
    except Exception:
        pass
    return 64 << 20


def init_params(key, input_dim, hidden_dim, z_dim):
    """PyTorch-Linear-style init: U(-1/sqrt(fan_in), +1/sqrt(fan_in)).

    Weights stored pre-transposed as [in_features, out_features]; biases as
    [1, out_features] rows.
    """
    ks = jax.random.split(key, 6)

    def lin(kw, kb, fan_in, fan_out):
        bound = 1.0 / jnp.sqrt(jnp.float32(fan_in))
        w = jax.random.uniform(kw, (fan_in, fan_out), jnp.float32, -bound, bound)
        b = jax.random.uniform(kb, (1, fan_out), jnp.float32, -bound, bound)
        return w, b

    w1, b1 = lin(ks[0], ks[1], input_dim, hidden_dim)
    wm, bm = lin(ks[2], ks[3], hidden_dim, z_dim)
    ws, bs = lin(ks[4], ks[5], hidden_dim, z_dim)
    return {"w1": w1, "b1": b1, "wm": wm, "bm": bm, "ws": ws, "bs": bs}


def prepare_params(params, *, compute_dtype=jnp.bfloat16):
    """One-time (out of the hot path) weight preparation.

    - fuse the mean/std heads into a single [H, 2Z] weight,
    - zero-pad hidden_dim up to a multiple of 128 (lane-dense h; exact),
    - zero-pad the fused head output dim up to a multiple of 128,
    - cast matmul weights to compute_dtype; biases stay f32.
    """
    input_dim, hidden_dim = params["w1"].shape
    z_dim = params["wm"].shape[1]
    two_z = 2 * z_dim
    h_pad = _round_up(hidden_dim, 128)
    p_out = _round_up(two_z, 128)

    w1 = params["w1"]
    b1 = params["b1"]
    wh = jnp.concatenate([params["wm"], params["ws"]], axis=1)   # [H, 2Z]
    bh = jnp.concatenate([params["bm"], params["bs"]], axis=1)   # [1, 2Z]

    if h_pad != hidden_dim:
        w1 = jnp.pad(w1, ((0, 0), (0, h_pad - hidden_dim)))
        b1 = jnp.pad(b1, ((0, 0), (0, h_pad - hidden_dim)))
        wh = jnp.pad(wh, ((0, h_pad - hidden_dim), (0, 0)))
    if p_out != two_z:
        wh = jnp.pad(wh, ((0, 0), (0, p_out - two_z)))
        bh = jnp.pad(bh, ((0, 0), (0, p_out - two_z)))

    return {
        "w1": jax.device_put(w1.astype(compute_dtype)),   # [input_dim, h_pad]
        "b1": jax.device_put(b1.astype(jnp.float32)),     # [1, h_pad]
        "wh": jax.device_put(wh.astype(compute_dtype)),   # [h_pad, p_out]
        "bh": jax.device_put(bh.astype(jnp.float32)),     # [1, p_out]
    }


# ----------------------------------------------------------------------------
# Forward wrapper
# ----------------------------------------------------------------------------
def encoder_forward(x, prepped, z_dim, *, block_batch=512,
                    out_dtype=jnp.float32, x_buffers=2):
    """x: [batch, input_dim] float.  prepped: output of prepare_params.

    Returns (mean, std), each [batch, z_dim] in out_dtype.
    """
    batch, input_dim = x.shape
    w1, b1, wh, bh = prepped["w1"], prepped["b1"], prepped["wh"], prepped["bh"]
    assert w1.shape[0] == input_dim, "input_dim mismatch with prepared params"
    h_pad = w1.shape[1]
    p_out = wh.shape[1]
    two_z = 2 * z_dim
    assert two_z <= p_out

    compute_dtype = w1.dtype
    itemsize_c = jnp.dtype(compute_dtype).itemsize
    out_itemsize = jnp.dtype(out_dtype).itemsize
    # Sublane pack for the batch (second-minor) dim: 8 f32 / 16 bf16 / 32 int8.
    pack = {1: 32, 2: 16, 4: 8}.get(itemsize_c, 8)

    # ---- Balanced batch tiling; keep >= 2 grid steps when there is enough
    # work so both v7x TensorCores get a share (no-op on 1-TC chips). ----
    n_steps = pl.cdiv(batch, block_batch)
    if n_steps < 2 and batch >= 4 * pack:
        n_steps = 2
    tb = _round_up(pl.cdiv(batch, n_steps), pack)

    # ---- Generation-aware VMEM budget; shrink tb (never weights) to fit. ----
    vmem_cap = _vmem_capacity_bytes()
    budget = vmem_cap - (8 << 20)            # headroom for compiler internals
    weight_bytes = ((input_dim * h_pad + h_pad * p_out) * itemsize_c
                    + (h_pad + p_out) * 4)   # single-buffered (Buffered(1))

    def tile_bytes(t):
        x_b = x_buffers * t * input_dim * itemsize_c   # pipelined x tiles
        o_b = 2 * t * p_out * out_itemsize             # double-buffered out
        h_b = 2 * t * h_pad * 4                        # f32 h intermediate/temps
        return x_b + o_b + h_b

    while tb > pack and weight_bytes + tile_bytes(tb) > budget:
        tb -= pack
    tb = max(tb, pack)

    padded_batch = _round_up(batch, tb)
    grid = (padded_batch // tb,)

    xc = x.astype(compute_dtype)
    if padded_batch != batch:
        xc = jnp.pad(xc, ((0, padded_batch - batch), (0, 0)))

    vmem_limit = int(max(4 << 20,
                         min(budget, weight_bytes + tile_bytes(tb) + (2 << 20))))

    flops = 2 * padded_batch * (input_dim * h_pad + h_pad * p_out)
    bytes_accessed = (padded_batch * input_dim * itemsize_c
                      + weight_bytes
                      + padded_batch * p_out * out_itemsize)
    cost = pl.CostEstimate(flops=flops, transcendentals=0,
                           bytes_accessed=bytes_accessed)

    def make_specs(use_buffer_hints):
        if use_buffer_hints and hasattr(pl, "Buffered"):
            kw_x = dict(pipeline_mode=pl.Buffered(x_buffers))
            kw_w = dict(pipeline_mode=pl.Buffered(1))   # resident: single buffer
        else:
            kw_x, kw_w = {}, {}
        in_specs = [
            pl.BlockSpec((tb, input_dim), lambda i: (i, 0), **kw_x),      # x tile
            pl.BlockSpec((input_dim, h_pad), lambda i: (0, 0), **kw_w),   # w1
            pl.BlockSpec((1, h_pad), lambda i: (0, 0), **kw_w),           # b1
            pl.BlockSpec((h_pad, p_out), lambda i: (0, 0), **kw_w),       # fused W
            pl.BlockSpec((1, p_out), lambda i: (0, 0), **kw_w),           # fused b
        ]
        out_specs = pl.BlockSpec((tb, p_out), lambda i: (i, 0))
        return in_specs, out_specs

    def run(use_buffer_hints):
        in_specs, out_specs = make_specs(use_buffer_hints)
        return pl.pallas_call(
            _encoder_kernel,
            out_shape=jax.ShapeDtypeStruct((padded_batch, p_out), out_dtype),
            grid=grid,
            in_specs=in_specs,
            out_specs=out_specs,
            compiler_params=pltpu.CompilerParams(
                dimension_semantics=("parallel",),
                vmem_limit_bytes=vmem_limit,
            ),
            cost_estimate=cost,
        )(xc, w1, b1, wh, bh)

    try:
        out = run(True)
    except Exception:
        # Defensive fallback if this JAX build rejects per-spec pipeline_mode.
        out = run(False)

    out = out[:batch]
    mean = out[:, :z_dim]
    std = out[:, z_dim:two_z]
    return mean, std


# ----------------------------------------------------------------------------
# Pure-JAX reference
# ----------------------------------------------------------------------------
def _reference(x, params):
    h = jnp.maximum(x @ params["w1"] + params["b1"], 0.0)
    return h @ params["wm"] + params["bm"], h @ params["ws"] + params["bs"]


if __name__ == "__main__":
    # Small shapes consistent with the module (fc1 -> ReLU -> two heads).
    # hidden_dim=100 deliberately exercises the hidden-dim lane padding path.
    batch, input_dim, hidden_dim, z_dim = 8, 64, 100, 20

    key = jax.random.PRNGKey(0)
    k_x, k_p = jax.random.split(key)
    x = jax.random.normal(k_x, (batch, input_dim), dtype=jnp.float32)
    params = init_params(k_p, input_dim, hidden_dim, z_dim)
    mean_ref, std_ref = _reference(x, params)

    # --- Exact f32 path. ---
    prep_f32 = prepare_params(params, compute_dtype=jnp.float32)
    mean, std = encoder_forward(x, prep_f32, z_dim)
    jax.block_until_ready((mean, std))
    assert mean.shape == (batch, z_dim) and std.shape == (batch, z_dim)
    assert jnp.allclose(mean, mean_ref, atol=1e-5, rtol=1e-5)
    assert jnp.allclose(std, std_ref, atol=1e-5, rtol=1e-5)

    # --- Default bf16 MXU path (f32 accumulation); loose tolerances. ---
    prep_bf16 = prepare_params(params)
    mean_bf, std_bf = encoder_forward(x, prep_bf16, z_dim)
    jax.block_until_ready((mean_bf, std_bf))
    assert jnp.allclose(mean_bf, mean_ref, atol=5e-2, rtol=5e-2)
    assert jnp.allclose(std_bf, std_ref, atol=5e-2, rtol=5e-2)

    # --- Ragged batch + multi-step grid + padding path (3 grid steps). ---
    batch2 = 20
    x2 = jax.random.normal(jax.random.PRNGKey(1), (batch2, input_dim), jnp.float32)
    mean2, std2 = encoder_forward(x2, prep_f32, z_dim, block_batch=8)
    jax.block_until_ready((mean2, std2))
    mean2_ref, std2_ref = _reference(x2, params)
    assert mean2.shape == (batch2, z_dim) and std2.shape == (batch2, z_dim)
    assert jnp.allclose(mean2, mean2_ref, atol=1e-5, rtol=1e-5)
    assert jnp.allclose(std2, std2_ref, atol=1e-5, rtol=1e-5)

    print("KERNEL_OK")
</pallas_src>

<mosaic_0001>
module attributes {stable_mosaic.version = 11 : i64} {
  func.func @_encoder_kernel(%arg0: i32, %arg1: memref<8x64xf32, #tpu.memory_space<vmem>>, %arg2: memref<64x128xf32, #tpu.memory_space<vmem>>, %arg3: memref<1x128xf32, #tpu.memory_space<vmem>>, %arg4: memref<128x128xf32, #tpu.memory_space<vmem>>, %arg5: memref<1x128xf32, #tpu.memory_space<vmem>>, %arg6: memref<8x128xf32, #tpu.memory_space<vmem>>) attributes {dimension_semantics = [#tpu.dimension_semantics<parallel>], iteration_bounds = array<i64: 1>, scalar_prefetch = 0 : i64, scratch_operands = 0 : i64, tpu.core_type = #tpu.core_type<tc>, window_params = [{pipeline_mode = #tpu.pipeline_mode<double_buffered>, transform_indices = @transform_0, window_bounds = array<i64: 8, 64>}, {pipeline_mode = #tpu.pipeline_mode<synchronous>, transform_indices = @transform_1, window_bounds = array<i64: 64, 128>}, {pipeline_mode = #tpu.pipeline_mode<synchronous>, transform_indices = @transform_2, window_bounds = array<i64: 1, 128>}, {pipeline_mode = #tpu.pipeline_mode<synchronous>, transform_indices = @transform_3, window_bounds = array<i64: 128, 128>}, {pipeline_mode = #tpu.pipeline_mode<synchronous>, transform_indices = @transform_4, window_bounds = array<i64: 1, 128>}, {transform_indices = @transform_5, window_bounds = array<i64: 8, 128>}]} {
    %c0 = arith.constant 0 : index
    %c0_0 = arith.constant 0 : index
    %0 = vector.load %arg1[%c0, %c0_0] : memref<8x64xf32, #tpu.memory_space<vmem>>, vector<8x64xf32>
    %c0_1 = arith.constant 0 : index
    %c0_2 = arith.constant 0 : index
    %1 = vector.load %arg2[%c0_1, %c0_2] : memref<64x128xf32, #tpu.memory_space<vmem>>, vector<64x128xf32>
    %cst = arith.constant dense<0.000000e+00> : vector<8x128xf32>
    %2 = tpu.matmul %0, %1, %cst {dimension_numbers = #tpu.dot_dimension_numbers<[1], [0], [0], [1], [0, 0, 1, 1], [], []>} : vector<8x64xf32>, vector<64x128xf32>, vector<8x128xf32> -> vector<8x128xf32>
    %c0_3 = arith.constant 0 : index
    %c0_4 = arith.constant 0 : index
    %3 = vector.load %arg3[%c0_3, %c0_4] : memref<1x128xf32, #tpu.memory_space<vmem>>, vector<1x128xf32>
    %4 = vector.broadcast %3 : vector<1x128xf32> to vector<8x128xf32>
    %5 = arith.addf %2, %4 : vector<8x128xf32>
    %cst_5 = arith.constant 0.000000e+00 : f32
    %6 = vector.broadcast %cst_5 : f32 to vector<8x128xf32>
    %7 = arith.maximumf %5, %6 : vector<8x128xf32>
    %c0_6 = arith.constant 0 : index
    %c0_7 = arith.constant 0 : index
    %8 = vector.load %arg4[%c0_6, %c0_7] : memref<128x128xf32, #tpu.memory_space<vmem>>, vector<128x128xf32>
    %cst_8 = arith.constant dense<0.000000e+00> : vector<8x128xf32>
    %9 = tpu.matmul %7, %8, %cst_8 {dimension_numbers = #tpu.dot_dimension_numbers<[1], [0], [0], [1], [0, 0, 1, 1], [], []>} : vector<8x128xf32>, vector<128x128xf32>, vector<8x128xf32> -> vector<8x128xf32>
    %c0_9 = arith.constant 0 : index
    %c0_10 = arith.constant 0 : index
    %10 = vector.load %arg5[%c0_9, %c0_10] : memref<1x128xf32, #tpu.memory_space<vmem>>, vector<1x128xf32>
    %11 = vector.broadcast %10 : vector<1x128xf32> to vector<8x128xf32>
    %12 = arith.addf %9, %11 : vector<8x128xf32>
    %c0_11 = arith.constant 0 : index
    %c0_12 = arith.constant 0 : index
    %13 = vector.load %arg6[%c0_11, %c0_12] : memref<8x128xf32, #tpu.memory_space<vmem>>, vector<8x128xf32>
    tpu.vector_store %arg6[%c0_11, %c0_12], %12 {strides = array<i32>} : memref<8x128xf32, #tpu.memory_space<vmem>>, vector<8x128xf32>,
    return
  }
  func.func @transform_0(%arg0: i32) -> (i32, i32) {
    %c0_i32 = arith.constant 0 : i32
    %c0_i32_0 = arith.constant 0 : i32
    return %arg0, %c0_i32 : i32, i32
  }
  func.func @transform_1(%arg0: i32) -> (i32, i32) {
    %c0_i32 = arith.constant 0 : i32
    %c0_i32_0 = arith.constant 0 : i32
    %c0_i32_1 = arith.constant 0 : i32
    return %c0_i32, %c0_i32_0 : i32, i32
  }
  func.func @transform_2(%arg0: i32) -> (i32, i32) {
    %c0_i32 = arith.constant 0 : i32
    %c0_i32_0 = arith.constant 0 : i32
    %c0_i32_1 = arith.constant 0 : i32
    return %c0_i32, %c0_i32_0 : i32, i32
  }
  func.func @transform_3(%arg0: i32) -> (i32, i32) {
    %c0_i32 = arith.constant 0 : i32
    %c0_i32_0 = arith.constant 0 : i32
    %c0_i32_1 = arith.constant 0 : i32
    return %c0_i32, %c0_i32_0 : i32, i32
  }
  func.func @transform_4(%arg0: i32) -> (i32, i32) {
    %c0_i32 = arith.constant 0 : i32
    %c0_i32_0 = arith.constant 0 : i32
    %c0_i32_1 = arith.constant 0 : i32
    return %c0_i32, %c0_i32_0 : i32, i32
  }
  func.func @transform_5(%arg0: i32) -> (i32, i32) {
    %c0_i32 = arith.constant 0 : i32
    %c0_i32_0 = arith.constant 0 : i32
    return %arg0, %c0_i32 : i32, i32
  }
}

module attributes {stable_mosaic.version = 11 : i64} {
  func.func @_encoder_kernel(%arg0: i32, %arg1: memref<8x64xf32, #tpu.memory_space<vmem>>, %arg2: memref<64x128xf32, #tpu.memory_space<vmem>>, %arg3: memref<1x128xf32, #tpu.memory_space<vmem>>, %arg4: memref<128x128xf32, #tpu.memory_space<vmem>>, %arg5: memref<1x128xf32, #tpu.memory_space<vmem>>, %arg6: memref<8x128xf32, #tpu.memory_space<vmem>>) attributes {dimension_semantics = [#tpu.dimension_semantics<parallel>], iteration_bounds = array<i64: 1>, scalar_prefetch = 0 : i64, scratch_operands = 0 : i64, tpu.core_type = #tpu.core_type<tc>, window_params = [{transform_indices = @transform_0, window_bounds = array<i64: 8, 64>}, {pipeline_mode = #tpu.pipeline_mode<synchronous>, transform_indices = @transform_1, window_bounds = array<i64: 64, 128>}, {pipeline_mode = #tpu.pipeline_mode<synchronous>, transform_indices = @transform_2, window_bounds = array<i64: 1, 128>}, {pipeline_mode = #tpu.pipeline_mode<synchronous>, transform_indices = @transform_3, window_bounds = array<i64: 128, 128>}, {pipeline_mode = #tpu.pipeline_mode<synchronous>, transform_indices = @transform_4, window_bounds = array<i64: 1, 128>}, {transform_indices = @transform_5, window_bounds = array<i64: 8, 128>}]} {
    %c0 = arith.constant 0 : index
    %c0_0 = arith.constant 0 : index
    %0 = vector.load %arg1[%c0, %c0_0] : memref<8x64xf32, #tpu.memory_space<vmem>>, vector<8x64xf32>
    %c0_1 = arith.constant 0 : index
    %c0_2 = arith.constant 0 : index
    %1 = vector.load %arg2[%c0_1, %c0_2] : memref<64x128xf32, #tpu.memory_space<vmem>>, vector<64x128xf32>
    %cst = arith.constant dense<0.000000e+00> : vector<8x128xf32>
    %2 = tpu.matmul %0, %1, %cst {dimension_numbers = #tpu.dot_dimension_numbers<[1], [0], [0], [1], [0, 0, 1, 1], [], []>} : vector<8x64xf32>, vector<64x128xf32>, vector<8x128xf32> -> vector<8x128xf32>
    %c0_3 = arith.constant 0 : index
    %c0_4 = arith.constant 0 : index
    %3 = vector.load %arg3[%c0_3, %c0_4] : memref<1x128xf32, #tpu.memory_space<vmem>>, vector<1x128xf32>
    %4 = vector.broadcast %3 : vector<1x128xf32> to vector<8x128xf32>
    %5 = arith.addf %2, %4 : vector<8x128xf32>
    %cst_5 = arith.constant 0.000000e+00 : f32
    %6 = vector.broadcast %cst_5 : f32 to vector<8x128xf32>
    %7 = arith.maximumf %5, %6 : vector<8x128xf32>
    %c0_6 = arith.constant 0 : index
    %c0_7 = arith.constant 0 : index
    %8 = vector.load %arg4[%c0_6, %c0_7] : memref<128x128xf32, #tpu.memory_space<vmem>>, vector<128x128xf32>
    %cst_8 = arith.constant dense<0.000000e+00> : vector<8x128xf32>
    %9 = tpu.matmul %7, %8, %cst_8 {dimension_numbers = #tpu.dot_dimension_numbers<[1], [0], [0], [1], [0, 0, 1, 1], [], []>} : vector<8x128xf32>, vector<128x128xf32>, vector<8x128xf32> -> vector<8x128xf32>
    %c0_9 = arith.constant 0 : index
    %c0_10 = arith.constant 0 : index
    %10 = vector.load %arg5[%c0_9, %c0_10] : memref<1x128xf32, #tpu.memory_space<vmem>>, vector<1x128xf32>
    %11 = vector.broadcast %10 : vector<1x128xf32> to vector<8x128xf32>
    %12 = arith.addf %9, %11 : vector<8x128xf32>
    %c0_11 = arith.constant 0 : index
    %c0_12 = arith.constant 0 : index
    %13 = vector.load %arg6[%c0_11, %c0_12] : memref<8x128xf32, #tpu.memory_space<vmem>>, vector<8x128xf32>
    tpu.vector_store %arg6[%c0_11, %c0_12], %12 {strides = array<i32>} : memref<8x128xf32, #tpu.memory_space<vmem>>, vector<8x128xf32>,
    return
  }
  func.func @transform_0(%arg0: i32) -> (i32, i32) {
    %c0_i32 = arith.constant 0 : i32
    %c0_i32_0 = arith.constant 0 : i32
    return %arg0, %c0_i32 : i32, i32
  }
  func.func @transform_1(%arg0: i32) -> (i32, i32) {
    %c0_i32 = arith.constant 0 : i32
    %c0_i32_0 = arith.constant 0 : i32
    %c0_i32_1 = arith.constant 0 : i32
    return %c0_i32, %c0_i32_0 : i32, i32
  }
  func.func @transform_2(%arg0: i32) -> (i32, i32) {
    %c0_i32 = arith.constant 0 : i32
    %c0_i32_0 = arith.constant 0 : i32
    %c0_i32_1 = arith.constant 0 : i32
    return %c0_i32, %c0_i32_0 : i32, i32
  }
  func.func @transform_3(%arg0: i32) -> (i32, i32) {
    %c0_i32 = arith.constant 0 : i32
    %c0_i32_0 = arith.constant 0 : i32
    %c0_i32_1 = arith.constant 0 : i32
    return %c0_i32, %c0_i32_0 : i32, i32
  }
  func.func @transform_4(%arg0: i32) -> (i32, i32) {
    %c0_i32 = arith.constant 0 : i32
    %c0_i32_0 = arith.constant 0 : i32
    %c0_i32_1 = arith.constant 0 : i32
    return %c0_i32, %c0_i32_0 : i32, i32
  }
  func.func @transform_5(%arg0: i32) -> (i32, i32) {
    %c0_i32 = arith.constant 0 : i32
    %c0_i32_0 = arith.constant 0 : i32
    return %arg0, %c0_i32 : i32, i32
  }
}

</mosaic_0001>

<llo_original>
// kernel: tpu_custom_call.1
$region0: #{tpu_custom_call.1}
  #allocation0 [shape = 'u32[]', space=smem, size = 0x4, offset = 0x4, fixed_abs, tag = 'smem constant byte address 0x4 - core index']
  #allocation1 [shape = 'u32[72,128]{1,0:T(1,128)}', space=vmem, size = 0x9000, scoped, tag = 'internal scratch']
  %s0 = inlined_call_operand.hbm [shape: f32[8,64], index: 0, kind: input, shape index: {}]
  %s1 = inlined_call_operand.hbm [shape: f32[64,128], index: 1, kind: input, shape index: {}]
  %s2 = inlined_call_operand.vmem [shape: f32[1,128], index: 2, kind: input, shape index: {}]
  %s3 = inlined_call_operand.hbm [shape: f32[128,128], index: 3, kind: input, shape index: {}]
  %s4 = inlined_call_operand.vmem [shape: f32[1,128], index: 4, kind: input, shape index: {}]
  %s5 = inlined_call_operand.hbm [shape: f32[8,128], index: 5, kind: output, shape index: {}]
  %s6 = sld [smem:[#allocation0]]
  $region42: #{tpu_custom_call.1} parent=0
    _
  %s8 = ssub.s32 1, %s6
  %s9 = scalar_select 0, %s8, %s6
  $region1: #{tpu_custom_call.1} parent=0
    #allocation2 [shape = 'u8[4096]{0}', space=vmem, size = 0x1000, scoped, tag = 'input window, operand 0, single buffered']
    #allocation3 [shape = 's32[1]{0}', space=sflag, size = 0x4, scoped, tag = 'scoped memory for tpu_custom_call.1']
    #allocation4 [shape = 's32[1]{0}', space=sflag, size = 0x4, scoped, tag = 'scoped memory for tpu_custom_call.1']
    #allocation5 [shape = 'u8[32768]{0}', space=vmem, size = 0x8000, scoped, tag = 'input window, operand 1, single buffered']
    #allocation6 [shape = 's32[1]{0}', space=sflag, size = 0x4, scoped, tag = 'scoped memory for tpu_custom_call.1']
    #allocation7 [shape = 'u8[65536]{0}', space=vmem, size = 0x10000, scoped, tag = 'input window, operand 3, single buffered']
    #allocation8 [shape = 'u8[4096]{0}', space=vmem, size = 0x1000, scoped, tag = 'output window, operand 0, single buffered']
    %10 = vsyncpa [#allocation3], 0
    %11 = vsyncpa [#allocation6], 0
    %12 = vsyncpa [#allocation4], 0
    // Predicated region
    $region2: #{tpu_custom_call.1} parent=1 // pred_check
      _
    $region3: #{tpu_custom_call.1} parent=1 // pred_check_branch
      %14 = sbr.rel (0) target = $region5
    $region4: #{tpu_custom_call.1} parent=1 // pred_region
      %16 = vsyncadd [#allocation3], 0
      %s18 = sshll.u32 %s0, 4
      %s19 = int_to_ptr.hbm [resolvable:$true] %s18
      %s20 = sshll.u32 [#allocation2], 4
      %s21 = int_to_ptr.vmem [resolvable:$true] %s20
      %23 = dma.hbm_to_vmem [thread:$0]  %s19, 128, %s21, [#allocation3]
    $region5: #{tpu_custom_call.1} parent=1 // pred_fallthru
      _
    // Predicated region
    $region6: #{tpu_custom_call.1} parent=1 // pred_check
      _
    $region7: #{tpu_custom_call.1} parent=1 // pred_check_branch
      %25 = sbr.rel (0) target = $region9
    $region8: #{tpu_custom_call.1} parent=1 // pred_region
      %27 = vsyncadd [#allocation6], 0
      %s28 = sshll.u32 %s1, 4
      %s29 = int_to_ptr.hbm [resolvable:$true] %s28
      %s30 = sshll.u32 [#allocation5], 4
      %s31 = int_to_ptr.vmem [resolvable:$true] %s30
      %36 = dma.hbm_to_vmem [thread:$0]  %s29, 1024, %s31, [#allocation6], 128, 128, 8
    $region9: #{tpu_custom_call.1} parent=1 // pred_fallthru
      _
    // Predicated region
    $region10: #{tpu_custom_call.1} parent=1 // pred_check
      _
    $region11: #{tpu_custom_call.1} parent=1 // pred_check_branch
      %38 = sbr.rel (0) target = $region13
    $region12: #{tpu_custom_call.1} parent=1 // pred_region
      _
    $region13: #{tpu_custom_call.1} parent=1 // pred_fallthru
      _
    // Predicated region
    $region14: #{tpu_custom_call.1} parent=1 // pred_check
      _
    $region15: #{tpu_custom_call.1} parent=1 // pred_check_branch
      %40 = sbr.rel (0) target = $region17
    $region16: #{tpu_custom_call.1} parent=1 // pred_region
      %42 = vsyncadd [#allocation6], 0
      %s43 = sshll.u32 %s3, 4
      %s44 = int_to_ptr.hbm [resolvable:$true] %s43
      %s45 = sshll.u32 [#allocation7], 4
      %s46 = int_to_ptr.vmem [resolvable:$true] %s45
      %51 = dma.hbm_to_vmem [thread:$0]  %s44, 2048, %s46, [#allocation6], 128, 128, 8
    $region17: #{tpu_custom_call.1} parent=1 // pred_fallthru
      _
    // Predicated region
    $region18: #{tpu_custom_call.1} parent=1 // pred_check
      _
    $region19: #{tpu_custom_call.1} parent=1 // pred_check_branch
      %53 = sbr.rel (0) target = $region21
    $region20: #{tpu_custom_call.1} parent=1 // pred_region
      _
    $region21: #{tpu_custom_call.1} parent=1 // pred_fallthru
      _
    // Predicated region
    $region22: #{tpu_custom_call.1} parent=1 // pred_check
      _
    $region23: #{tpu_custom_call.1} parent=1 // pred_check_branch
      %55 = sbr.rel (0) target = $region25
    $region24: #{tpu_custom_call.1} parent=1 // pred_region
      %57 = dma.done [#allocation3], 128
    $region25: #{tpu_custom_call.1} parent=1 // pred_fallthru
      _
    // Predicated region
    $region26: #{tpu_custom_call.1} parent=1 // pred_check
      _
    $region27: #{tpu_custom_call.1} parent=1 // pred_check_branch
      %59 = sbr.rel (0) target = $region29
    $region28: #{tpu_custom_call.1} parent=1 // pred_region
      %61 = dma.done [#allocation6], 1024
    $region29: #{tpu_custom_call.1} parent=1 // pred_fallthru
      _
    // Predicated region
    $region30: #{tpu_custom_call.1} parent=1 // pred_check
      _
    $region31: #{tpu_custom_call.1} parent=1 // pred_check_branch
      %63 = sbr.rel (0) target = $region33
    $region32: #{tpu_custom_call.1} parent=1 // pred_region
      %65 = dma.done [#allocation6], 2048
    $region33: #{tpu_custom_call.1} parent=1 // pred_fallthru
      _
    %v66 = vld [vmem:[#allocation2] sm:$0xff]
    %v67 = vld [vmem:[#allocation5] sm:$0xff]
    %v68 = vld [vmem:[#allocation5 + $0x8] sm:$0xff]
    %v69 = vld [vmem:[#allocation5 + $0x10] sm:$0xff]
    %v70 = vld [vmem:[#allocation5 + $0x18] sm:$0xff]
    %v71 = vld [vmem:[#allocation5 + $0x20] sm:$0xff]
    %v72 = vld [vmem:[#allocation5 + $0x28] sm:$0xff]
    %v73 = vld [vmem:[#allocation5 + $0x30] sm:$0xff]
    %v74 = vld [vmem:[#allocation5 + $0x38] sm:$0xff]
    %v75 = vld [vmem:[%s2] sm:$0x1]
    %v77 = vperm.slane %v75, 0
    %vm79 = vcmask 523264
    %v81 = vsel %vm79, %v66, 0
    %83 = vmatpush.msra.mxu0 0.0
    %84 = vmatpush.msra.mxu0 0.0
    %85 = vmatpush.msra.mxu0 0.0
    %86 = vmatpush.msra.mxu0 0.0
    %87 = vmatpush.msra.mxu0 0.0
    %88 = vmatpush.msra.mxu0 0.0
    %89 = vmatpush.msra.mxu0 0.0
    %90 = vmatpush.msra.mxu0 0.0
    %91 = vmatpush.msra.mxu0 %v74
    %92 = vmatpush.msra.mxu0 %v73
    %93 = vmatpush.msra.mxu0 %v72
    %94 = vmatpush.msra.mxu0 %v71
    %95 = vmatpush.msra.mxu0 %v70
    %96 = vmatpush.msra.mxu0 %v69
    %97 = vmatpush.msra.mxu0 %v68
    %98 = vmatpush.msra.mxu0 %v67
    %99 = vmatmul.f32.gmra.mxu0 %v81
    %v100 = vpop.f32.mrf.mxu0
    %v101 = vadd.f32 %v77, %v100
    %102 = vdwg.mxu0
    %v103 = vmax.f32 %v101, 0.0
    %v104 = vld [vmem:[#allocation7] sm:$0xff]
    %v105 = vld [vmem:[#allocation7 + $0x8] sm:$0xff]
    %v106 = vld [vmem:[#allocation7 + $0x10] sm:$0xff]
    %v107 = vld [vmem:[#allocation7 + $0x18] sm:$0xff]
    %v108 = vld [vmem:[#allocation7 + $0x20] sm:$0xff]
    %v109 = vld [vmem:[#allocation7 + $0x28] sm:$0xff]
    %v110 = vld [vmem:[#allocation7 + $0x30] sm:$0xff]
    %v111 = vld [vmem:[#allocation7 + $0x38] sm:$0xff]
    %v112 = vld [vmem:[#allocation7 + $0x40] sm:$0xff]
    %v113 = vld [vmem:[#allocation7 + $0x48] sm:$0xff]
    %v114 = vld [vmem:[#allocation7 + $0x50] sm:$0xff]
    %v115 = vld [vmem:[#allocation7 + $0x58] sm:$0xff]
    %v116 = vld [vmem:[#allocation7 + $0x60] sm:$0xff]
    %v117 = vld [vmem:[#allocation7 + $0x68] sm:$0xff]
    %v118 = vld [vmem:[#allocation7 + $0x70] sm:$0xff]
    %v119 = vld [vmem:[#allocation7 + $0x78] sm:$0xff]
    %v120 = vld [vmem:[%s4] sm:$0x1]
    %v122 = vperm.slane %v120, 0
    %124 = vmatpush.msra.mxu0 %v119
    %125 = vmatpush.msra.mxu0 %v118
    %126 = vmatpush.msra.mxu0 %v117
    %127 = vmatpush.msra.mxu0 %v116
    %128 = vmatpush.msra.mxu0 %v115
    %129 = vmatpush.msra.mxu0 %v114
    %130 = vmatpush.msra.mxu0 %v113
    %131 = vmatpush.msra.mxu0 %v112
    %132 = vmatpush.msra.mxu0 %v111
    %133 = vmatpush.msra.mxu0 %v110
    %134 = vmatpush.msra.mxu0 %v109
    %135 = vmatpush.msra.mxu0 %v108
    %136 = vmatpush.msra.mxu0 %v107
    %137 = vmatpush.msra.mxu0 %v106
    %138 = vmatpush.msra.mxu0 %v105
    %139 = vmatpush.msra.mxu0 %v104
    %140 = vmatmul.f32.gmra.mxu0 %v103
    %v141 = vpop.f32.mrf.mxu0
    %v142 = vadd.f32 %v122, %v141
    %143 = vdwg.mxu0
    %144 = vst [vmem:[#allocation8] sm:$0xff] %v142
    // Predicated region
    $region34: #{tpu_custom_call.1} parent=1 // pred_check
      _
    $region35: #{tpu_custom_call.1} parent=1 // pred_check_branch
      %146 = sbr.rel (0) target = $region37
    $region36: #{tpu_custom_call.1} parent=1 // pred_region
      %148 = vsyncadd [#allocation4], 0
      %s150 = sshll.u32 [#allocation8], 4
      %s151 = int_to_ptr.vmem [resolvable:$true] %s150
      %s152 = sshll.u32 %s5, 4
      %s153 = int_to_ptr.hbm [resolvable:$true] %s152
      %155 = dma.vmem_to_hbm [thread:$0]  %s151, 128, %s153, [#allocation4]
    $region37: #{tpu_custom_call.1} parent=1 // pred_fallthru
      _
    // Predicated region
    $region38: #{tpu_custom_call.1} parent=1 // pred_check
      _
    $region39: #{tpu_custom_call.1} parent=1 // pred_check_branch
      %157 = sbr.rel (0) target = $region41
    $region40: #{tpu_custom_call.1} parent=1 // pred_region
      %159 = dma.done [#allocation4], 128
    $region41: #{tpu_custom_call.1} parent=1 // pred_fallthru
      _
    %160 = vsyncpa [#allocation3], 1
    %161 = vsyncpa [#allocation6], 1
    %162 = vsyncpa [#allocation4], 1

// kernel: tpu_custom_call.1
$region0: #{tpu_custom_call.1}
  #allocation0 [shape = 'u32[]', space=smem, size = 0x4, offset = 0x4, fixed_abs, tag = 'smem constant byte address 0x4 - core index']
  #allocation1 [shape = 'u32[72,128]{1,0:T(1,128)}', space=vmem, size = 0x9000, scoped, tag = 'internal scratch']
  %s0 = inlined_call_operand.hbm [shape: f32[8,64], index: 0, kind: input, shape index: {}]
  %s1 = inlined_call_operand.hbm [shape: f32[64,128], index: 1, kind: input, shape index: {}]
  %s2 = inlined_call_operand.vmem [shape: f32[1,128], index: 2, kind: input, shape index: {}]
  %s3 = inlined_call_operand.hbm [shape: f32[128,128], index: 3, kind: input, shape index: {}]
  %s4 = inlined_call_operand.vmem [shape: f32[1,128], index: 4, kind: input, shape index: {}]
  %s5 = inlined_call_operand.hbm [shape: f32[8,128], index: 5, kind: output, shape index: {}]
  %s6 = sld [smem:[#allocation0]]
  $region42: #{tpu_custom_call.1} parent=0
    _
  %s8 = ssub.s32 1, %s6
  %s9 = scalar_select 0, %s8, %s6
  $region1: #{tpu_custom_call.1} parent=0
    #allocation2 [shape = 'u8[4096]{0}', space=vmem, size = 0x1000, scoped, tag = 'input window, operand 0, single buffered']
    #allocation3 [shape = 's32[1]{0}', space=sflag, size = 0x4, scoped, tag = 'scoped memory for tpu_custom_call.1']
    #allocation4 [shape = 's32[1]{0}', space=sflag, size = 0x4, scoped, tag = 'scoped memory for tpu_custom_call.1']
    #allocation5 [shape = 'u8[32768]{0}', space=vmem, size = 0x8000, scoped, tag = 'input window, operand 1, single buffered']
    #allocation6 [shape = 's32[1]{0}', space=sflag, size = 0x4, scoped, tag = 'scoped memory for tpu_custom_call.1']
    #allocation7 [shape = 'u8[65536]{0}', space=vmem, size = 0x10000, scoped, tag = 'input window, operand 3, single buffered']
    #allocation8 [shape = 'u8[4096]{0}', space=vmem, size = 0x1000, scoped, tag = 'output window, operand 0, single buffered']
    %10 = vsyncpa [#allocation3], 0
    %11 = vsyncpa [#allocation6], 0
    %12 = vsyncpa [#allocation4], 0
    // Predicated region
    $region2: #{tpu_custom_call.1} parent=1 // pred_check
      _
    $region3: #{tpu_custom_call.1} parent=1 // pred_check_branch
      %14 = sbr.rel (0) target = $region5
    $region4: #{tpu_custom_call.1} parent=1 // pred_region
      %16 = vsyncadd [#allocation3], 0
      %s18 = sshll.u32 %s0, 4
      %s19 = int_to_ptr.hbm [resolvable:$true] %s18
      %s20 = sshll.u32 [#allocation2], 4
      %s21 = int_to_ptr.vmem [resolvable:$true] %s20
      %23 = dma.hbm_to_vmem [thread:$0]  %s19, 128, %s21, [#allocation3]
    $region5: #{tpu_custom_call.1} parent=1 // pred_fallthru
      _
    // Predicated region
    $region6: #{tpu_custom_call.1} parent=1 // pred_check
      _
    $region7: #{tpu_custom_call.1} parent=1 // pred_check_branch
      %25 = sbr.rel (0) target = $region9
    $region8: #{tpu_custom_call.1} parent=1 // pred_region
      %27 = vsyncadd [#allocation6], 0
      %s28 = sshll.u32 %s1, 4
      %s29 = int_to_ptr.hbm [resolvable:$true] %s28
      %s30 = sshll.u32 [#allocation5], 4
      %s31 = int_to_ptr.vmem [resolvable:$true] %s30
      %36 = dma.hbm_to_vmem [thread:$0]  %s29, 1024, %s31, [#allocation6], 128, 128, 8
    $region9: #{tpu_custom_call.1} parent=1 // pred_fallthru
      _
    // Predicated region
    $region10: #{tpu_custom_call.1} parent=1 // pred_check
      _
    $region11: #{tpu_custom_call.1} parent=1 // pred_check_branch
      %38 = sbr.rel (0) target = $region13
    $region12: #{tpu_custom_call.1} parent=1 // pred_region
      _
    $region13: #{tpu_custom_call.1} parent=1 // pred_fallthru
      _
    // Predicated region
    $region14: #{tpu_custom_call.1} parent=1 // pred_check
      _
    $region15: #{tpu_custom_call.1} parent=1 // pred_check_branch
      %40 = sbr.rel (0) target = $region17
    $region16: #{tpu_custom_call.1} parent=1 // pred_region
      %42 = vsyncadd [#allocation6], 0
      %s43 = sshll.u32 %s3, 4
      %s44 = int_to_ptr.hbm [resolvable:$true] %s43
      %s45 = sshll.u32 [#allocation7], 4
      %s46 = int_to_ptr.vmem [resolvable:$true] %s45
      %51 = dma.hbm_to_vmem [thread:$0]  %s44, 2048, %s46, [#allocation6], 128, 128, 8
    $region17: #{tpu_custom_call.1} parent=1 // pred_fallthru
      _
    // Predicated region
    $region18: #{tpu_custom_call.1} parent=1 // pred_check
      _
    $region19: #{tpu_custom_call.1} parent=1 // pred_check_branch
      %53 = sbr.rel (0) target = $region21
    $region20: #{tpu_custom_call.1} parent=1 // pred_region
      _
    $region21: #{tpu_custom_call.1} parent=1 // pred_fallthru
      _
    // Predicated region
    $region22: #{tpu_custom_call.1} parent=1 // pred_check
      _
    $region23: #{tpu_custom_call.1} parent=1 // pred_check_branch
      %55 = sbr.rel (0) target = $region25
    $region24: #{tpu_custom_call.1} parent=1 // pred_region
      %57 = dma.done [#allocation3], 128
    $region25: #{tpu_custom_call.1} parent=1 // pred_fallthru
      _
    // Predicated region
    $region26: #{tpu_custom_call.1} parent=1 // pred_check
      _
    $region27: #{tpu_custom_call.1} parent=1 // pred_check_branch
      %59 = sbr.rel (0) target = $region29
    $region28: #{tpu_custom_call.1} parent=1 // pred_region
      %61 = dma.done [#allocation6], 1024
    $region29: #{tpu_custom_call.1} parent=1 // pred_fallthru
      _
    // Predicated region
    $region30: #{tpu_custom_call.1} parent=1 // pred_check
      _
    $region31: #{tpu_custom_call.1} parent=1 // pred_check_branch
      %63 = sbr.rel (0) target = $region33
    $region32: #{tpu_custom_call.1} parent=1 // pred_region
      %65 = dma.done [#allocation6], 2048
    $region33: #{tpu_custom_call.1} parent=1 // pred_fallthru
      _
    %v66 = vld [vmem:[#allocation2] sm:$0xff]
    %v67 = vld [vmem:[#allocation5] sm:$0xff]
    %v68 = vld [vmem:[#allocation5 + $0x8] sm:$0xff]
    %v69 = vld [vmem:[#allocation5 + $0x10] sm:$0xff]
    %v70 = vld [vmem:[#allocation5 + $0x18] sm:$0xff]
    %v71 = vld [vmem:[#allocation5 + $0x20] sm:$0xff]
    %v72 = vld [vmem:[#allocation5 + $0x28] sm:$0xff]
    %v73 = vld [vmem:[#allocation5 + $0x30] sm:$0xff]
    %v74 = vld [vmem:[#allocation5 + $0x38] sm:$0xff]
    %v75 = vld [vmem:[%s2] sm:$0x1]
    %v77 = vperm.slane %v75, 0
    %vm79 = vcmask 523264
    %v81 = vsel %vm79, %v66, 0
    %83 = vmatpush.msra.mxu0 0.0
    %84 = vmatpush.msra.mxu0 0.0
    %85 = vmatpush.msra.mxu0 0.0
    %86 = vmatpush.msra.mxu0 0.0
    %87 = vmatpush.msra.mxu0 0.0
    %88 = vmatpush.msra.mxu0 0.0
    %89 = vmatpush.msra.mxu0 0.0
    %90 = vmatpush.msra.mxu0 0.0
    %91 = vmatpush.msra.mxu0 %v74
    %92 = vmatpush.msra.mxu0 %v73
    %93 = vmatpush.msra.mxu0 %v72
    %94 = vmatpush.msra.mxu0 %v71
    %95 = vmatpush.msra.mxu0 %v70
    %96 = vmatpush.msra.mxu0 %v69
    %97 = vmatpush.msra.mxu0 %v68
    %98 = vmatpush.msra.mxu0 %v67
    %99 = vmatmul.f32.gmra.mxu0 %v81
    %v100 = vpop.f32.mrf.mxu0
    %v101 = vadd.f32 %v77, %v100
    %102 = vdwg.mxu0
    %v103 = vmax.f32 %v101, 0.0
    %v104 = vld [vmem:[#allocation7] sm:$0xff]
    %v105 = vld [vmem:[#allocation7 + $0x8] sm:$0xff]
    %v106 = vld [vmem:[#allocation7 + $0x10] sm:$0xff]
    %v107 = vld [vmem:[#allocation7 + $0x18] sm:$0xff]
    %v108 = vld [vmem:[#allocation7 + $0x20] sm:$0xff]
    %v109 = vld [vmem:[#allocation7 + $0x28] sm:$0xff]
    %v110 = vld [vmem:[#allocation7 + $0x30] sm:$0xff]
    %v111 = vld [vmem:[#allocation7 + $0x38] sm:$0xff]
    %v112 = vld [vmem:[#allocation7 + $0x40] sm:$0xff]
    %v113 = vld [vmem:[#allocation7 + $0x48] sm:$0xff]
    %v114 = vld [vmem:[#allocation7 + $0x50] sm:$0xff]
    %v115 = vld [vmem:[#allocation7 + $0x58] sm:$0xff]
    %v116 = vld [vmem:[#allocation7 + $0x60] sm:$0xff]
    %v117 = vld [vmem:[#allocation7 + $0x68] sm:$0xff]
    %v118 = vld [vmem:[#allocation7 + $0x70] sm:$0xff]
    %v119 = vld [vmem:[#allocation7 + $0x78] sm:$0xff]
    %v120 = vld [vmem:[%s4] sm:$0x1]
    %v122 = vperm.slane %v120, 0
    %124 = vmatpush.msra.mxu0 %v119
    %125 = vmatpush.msra.mxu0 %v118
    %126 = vmatpush.msra.mxu0 %v117
    %127 = vmatpush.msra.mxu0 %v116
    %128 = vmatpush.msra.mxu0 %v115
    %129 = vmatpush.msra.mxu0 %v114
    %130 = vmatpush.msra.mxu0 %v113
    %131 = vmatpush.msra.mxu0 %v112
    %132 = vmatpush.msra.mxu0 %v111
    %133 = vmatpush.msra.mxu0 %v110
    %134 = vmatpush.msra.mxu0 %v109
    %135 = vmatpush.msra.mxu0 %v108
    %136 = vmatpush.msra.mxu0 %v107
    %137 = vmatpush.msra.mxu0 %v106
    %138 = vmatpush.msra.mxu0 %v105
    %139 = vmatpush.msra.mxu0 %v104
    %140 = vmatmul.f32.gmra.mxu0 %v103
    %v141 = vpop.f32.mrf.mxu0
    %v142 = vadd.f32 %v122, %v141
    %143 = vdwg.mxu0
    %144 = vst [vmem:[#allocation8] sm:$0xff] %v142
    // Predicated region
    $region34: #{tpu_custom_call.1} parent=1 // pred_check
      _
    $region35: #{tpu_custom_call.1} parent=1 // pred_check_branch
      %146 = sbr.rel (0) target = $region37
    $region36: #{tpu_custom_call.1} parent=1 // pred_region
      %148 = vsyncadd [#allocation4], 0
      %s150 = sshll.u32 [#allocation8], 4
      %s151 = int_to_ptr.vmem [resolvable:$true] %s150
      %s152 = sshll.u32 %s5, 4
      %s153 = int_to_ptr.hbm [resolvable:$true] %s152
      %155 = dma.vmem_to_hbm [thread:$0]  %s151, 128, %s153, [#allocation4]
    $region37: #{tpu_custom_call.1} parent=1 // pred_fallthru
      _
    // Predicated region
    $region38: #{tpu_custom_call.1} parent=1 // pred_check
      _
    $region39: #{tpu_custom_call.1} parent=1 // pred_check_branch
      %157 = sbr.rel (0) target = $region41
    $region40: #{tpu_custom_call.1} parent=1 // pred_region
      %159 = dma.done [#allocation4], 128
    $region41: #{tpu_custom_call.1} parent=1 // pred_fallthru
      _
    %160 = vsyncpa [#allocation3], 1
    %161 = vsyncpa [#allocation6], 1
    %162 = vsyncpa [#allocation4], 1

</llo_original>
